<compile_context>
chip_gen: v7x
topology: tpu7x:2x2x1
jax: 0.10.0
libtpu: 0.0.40
codegen_flags: <defaults>
</compile_context>

<pallas_src>
import functools

import jax
import jax.numpy as jnp
from jax.experimental import pallas as pl
from jax.experimental.pallas import tpu as pltpu


def _round_up(n, m):
    return ((n + m - 1) // m) * m


def mlp_kernel(x_ref, p_ref, o_ref, *, w_offsets, b_offset, in_dims, out_dims):
    # x_ref: (bm, C*H*W) lane-dense. p_ref: single packed parameter slab,
    # weights stored (in_features, out_features) so `y = x @ W + b` matches
    # torch.nn.Linear's `x @ W.T + b`. Pooling already folded into layer 0.
    x = x_ref[...]
    if x.dtype != jnp.float32:
        x = x.astype(jnp.float32)

    n_layers = len(in_dims)
    h = x
    for i in range(n_layers):
        w_off = w_offsets[i]
        w = p_ref[w_off:w_off + in_dims[i], :out_dims[i]]           # static slice
        b = p_ref[b_offset + i:b_offset + i + 1, :out_dims[i]]      # static slice
        h = jnp.dot(h, w, preferred_element_type=jnp.float32) + b
        if i < n_layers - 1:                                        # hidden blocks: ReLU
            h = jnp.maximum(h, 0.0)

    o_ref[...] = h.astype(o_ref.dtype)


def mlp_forward(x, params):
    """x: (B, C, H, W) NCHW; params: [w0, b0, w1, b1, ..., w_last, b_last].

    Weights stored (in_features, out_features); biases may be (N,) or (1, N).
    """
    B, C, H, W = x.shape
    weights = list(params[0::2])
    biases = list(params[1::2])
    n_layers = len(weights)
    assert n_layers >= 3, "expects input block, >=1 hidden block, output block"
    n_blk = n_layers - 2

    dim = weights[0].shape[1]
    output_dim = weights[-1].shape[1]
    # Cheap insurance on layout conventions (per review).
    assert weights[0].shape == (C, dim)
    for w in weights[1:-1]:
        assert w.shape == (dim, dim)
    assert weights[-1].shape == (dim, output_dim)

    CHW = C * H * W
    max_d = max(dim, output_dim)

    # Fold the global (H,W) sum-pool into the first matmul:
    #   sum_hw x[b,c,hw] * w0[c,d]  ==  x.reshape(B, C*H*W) @ repeat(w0, H*W, axis=0)
    w0_exp = jnp.repeat(weights[0].astype(jnp.float32), H * W, axis=0)   # (C*H*W, dim)
    layer_ws = [w0_exp] + [w.astype(jnp.float32) for w in weights[1:]]
    in_dims = tuple([CHW] + [dim] * (n_blk + 1))
    out_dims = tuple([dim] * (n_blk + 1) + [output_dim])

    # Pack everything into ONE zero-padded slab (width = max_d). Each weight
    # section is padded to a multiple of 8 rows; biases go in trailing rows.
    sections = []
    w_offsets = []
    row = 0
    for w in layer_ws:
        w_offsets.append(row)
        rows = _round_up(w.shape[0], 8)
        sec = jnp.zeros((rows, max_d), jnp.float32)
        sec = sec.at[:w.shape[0], :w.shape[1]].set(w)
        sections.append(sec)
        row += rows
    b_offset = row
    b_rows = _round_up(n_layers, 8)
    bsec = jnp.zeros((b_rows, max_d), jnp.float32)
    for i, b in enumerate(biases):
        b1 = b.reshape(-1).astype(jnp.float32)
        bsec = bsec.at[i, :b1.shape[0]].set(b1)
    sections.append(bsec)
    p_slab = jnp.concatenate(sections, axis=0)           # (total_rows, max_d)

    # Lane-dense flattened input; batch-tiled grid (parallel across v7x TCs).
    x_flat = x.reshape(B, CHW)
    if B > 128 and B % 128 == 0:
        bm = 128
    else:
        bm = B                                           # single block at small B
    n_bm = B // bm

    flops = 2 * B * sum(i * o for i, o in zip(in_dims, out_dims))
    bytes_accessed = int(x_flat.size * x_flat.dtype.itemsize
                         + p_slab.size * 4 + B * output_dim * 4)

    kernel = functools.partial(
        mlp_kernel,
        w_offsets=tuple(w_offsets), b_offset=b_offset,
        in_dims=in_dims, out_dims=out_dims)

    return pl.pallas_call(
        kernel,
        out_shape=jax.ShapeDtypeStruct((B, output_dim), jnp.float32),
        grid=(n_bm,),
        in_specs=[
            pl.BlockSpec((bm, CHW), lambda i: (i, 0)),
            pl.BlockSpec(tuple(p_slab.shape), lambda i: (0, 0)),   # resident params
        ],
        out_specs=pl.BlockSpec((bm, output_dim), lambda i: (i, 0)),
        compiler_params=pltpu.CompilerParams(
            dimension_semantics=("parallel",)),
        cost_estimate=pl.CostEstimate(
            flops=flops, transcendentals=0, bytes_accessed=bytes_accessed),
    )(x_flat, p_slab)


def init_params(key, input_dim, dim, output_dim, n_blk):
    """Deterministic PyTorch-Linear-style init; weights stored (in, out)."""
    dims = [input_dim] + [dim] * (n_blk + 1) + [output_dim]
    params = []
    for i in range(len(dims) - 1):
        key, kw, kb = jax.random.split(key, 3)
        fan_in = dims[i]
        bound = 1.0 / (fan_in ** 0.5)
        w = jax.random.uniform(kw, (dims[i], dims[i + 1]), jnp.float32, -bound, bound)
        b = jax.random.uniform(kb, (1, dims[i + 1]), jnp.float32, -bound, bound)
        params += [w, b]
    return params


def mlp_reference(x, params):
    h = jnp.sum(x, axis=(2, 3))
    n_layers = len(params) // 2
    for i in range(n_layers):
        h = h @ params[2 * i] + params[2 * i + 1]
        if i < n_layers - 1:
            h = jnp.maximum(h, 0.0)
    return h


if __name__ == "__main__":
    key = jax.random.PRNGKey(0)
    kx, kp = jax.random.split(key)

    # Small shapes consistent with the module: NCHW input, global_pool=True.
    B, C, H, W = 2, 4, 16, 16
    input_dim, dim, output_dim, n_blk = C, 32, 8, 2

    x = jax.random.normal(kx, (B, C, H, W), jnp.float32)
    params = init_params(kp, input_dim, dim, output_dim, n_blk)

    out = mlp_forward(x, params)
    jax.block_until_ready(out)

    ref = mlp_reference(x, params)
    assert out.shape == (B, output_dim)
    # Slightly looser tol: pooling is folded into a K=C*H*W MXU accumulation,
    # which sums in a different order than the reference's pool-then-matmul.
    assert jnp.allclose(out, ref, atol=5e-4, rtol=5e-4), "mismatch vs reference"

    print("KERNEL_OK")
</pallas_src>

<mosaic_0001>
module attributes {stable_mosaic.version = 11 : i64} {
  func.func @mlp_kernel(%arg0: i32, %arg1: memref<2x1024xf32, #tpu.memory_space<vmem>>, %arg2: memref<1128x32xf32, #tpu.memory_space<vmem>>, %arg3: memref<2x8xf32, #tpu.memory_space<vmem>>) attributes {dimension_semantics = [#tpu.dimension_semantics<parallel>], iteration_bounds = array<i64: 1>, scalar_prefetch = 0 : i64, scratch_operands = 0 : i64, tpu.core_type = #tpu.core_type<tc>, window_params = [{transform_indices = @transform_0, window_bounds = array<i64: 2, 1024>}, {pipeline_mode = #tpu.pipeline_mode<synchronous>, transform_indices = @transform_1, window_bounds = array<i64: 1128, 32>}, {transform_indices = @transform_2, window_bounds = array<i64: 2, 8>}]} {
    %c0 = arith.constant 0 : index
    %c0_0 = arith.constant 0 : index
    %0 = vector.load %arg1[%c0, %c0_0] : memref<2x1024xf32, #tpu.memory_space<vmem>>, vector<2x1024xf32>
    %c0_1 = arith.constant 0 : index
    %c0_2 = arith.constant 0 : index
    %1 = vector.load %arg2[%c0_1, %c0_2] : memref<1128x32xf32, #tpu.memory_space<vmem>>, vector<1024x32xf32>
    %c1120 = arith.constant 1120 : index
    %c0_3 = arith.constant 0 : index
    %2 = vector.load %arg2[%c1120, %c0_3] : memref<1128x32xf32, #tpu.memory_space<vmem>>, vector<1x32xf32>
    %cst = arith.constant dense<0.000000e+00> : vector<2x32xf32>
    %3 = tpu.matmul %0, %1, %cst {dimension_numbers = #tpu.dot_dimension_numbers<[1], [0], [0], [1], [0, 0, 1, 1], [], []>} : vector<2x1024xf32>, vector<1024x32xf32>, vector<2x32xf32> -> vector<2x32xf32>
    %4 = vector.broadcast %2 : vector<1x32xf32> to vector<2x32xf32>
    %5 = arith.addf %3, %4 : vector<2x32xf32>
    %cst_4 = arith.constant 0.000000e+00 : f32
    %6 = vector.broadcast %cst_4 : f32 to vector<2x32xf32>
    %7 = arith.maximumf %5, %6 : vector<2x32xf32>
    %c1024 = arith.constant 1024 : index
    %c0_5 = arith.constant 0 : index
    %8 = vector.load %arg2[%c1024, %c0_5] : memref<1128x32xf32, #tpu.memory_space<vmem>>, vector<32x32xf32>
    %c1121 = arith.constant 1121 : index
    %c0_6 = arith.constant 0 : index
    %9 = vector.load %arg2[%c1121, %c0_6] : memref<1128x32xf32, #tpu.memory_space<vmem>>, vector<1x32xf32>
    %cst_7 = arith.constant dense<0.000000e+00> : vector<2x32xf32>
    %10 = tpu.matmul %7, %8, %cst_7 {dimension_numbers = #tpu.dot_dimension_numbers<[1], [0], [0], [1], [0, 0, 1, 1], [], []>} : vector<2x32xf32>, vector<32x32xf32>, vector<2x32xf32> -> vector<2x32xf32>
    %11 = vector.broadcast %9 : vector<1x32xf32> to vector<2x32xf32>
    %12 = arith.addf %10, %11 : vector<2x32xf32>
    %cst_8 = arith.constant 0.000000e+00 : f32
    %13 = vector.broadcast %cst_8 : f32 to vector<2x32xf32>
    %14 = arith.maximumf %12, %13 : vector<2x32xf32>
    %c1056 = arith.constant 1056 : index
    %c0_9 = arith.constant 0 : index
    %15 = vector.load %arg2[%c1056, %c0_9] : memref<1128x32xf32, #tpu.memory_space<vmem>>, vector<32x32xf32>
    %c1122 = arith.constant 1122 : index
    %c0_10 = arith.constant 0 : index
    %16 = vector.load %arg2[%c1122, %c0_10] : memref<1128x32xf32, #tpu.memory_space<vmem>>, vector<1x32xf32>
    %cst_11 = arith.constant dense<0.000000e+00> : vector<2x32xf32>
    %17 = tpu.matmul %14, %15, %cst_11 {dimension_numbers = #tpu.dot_dimension_numbers<[1], [0], [0], [1], [0, 0, 1, 1], [], []>} : vector<2x32xf32>, vector<32x32xf32>, vector<2x32xf32> -> vector<2x32xf32>
    %18 = vector.broadcast %16 : vector<1x32xf32> to vector<2x32xf32>
    %19 = arith.addf %17, %18 : vector<2x32xf32>
    %cst_12 = arith.constant 0.000000e+00 : f32
    %20 = vector.broadcast %cst_12 : f32 to vector<2x32xf32>
    %21 = arith.maximumf %19, %20 : vector<2x32xf32>
    %c1088 = arith.constant 1088 : index
    %c0_13 = arith.constant 0 : index
    %22 = vector.load %arg2[%c1088, %c0_13] : memref<1128x32xf32, #tpu.memory_space<vmem>>, vector<32x8xf32>
    %c1123 = arith.constant 1123 : index
    %c0_14 = arith.constant 0 : index
    %23 = vector.load %arg2[%c1123, %c0_14] : memref<1128x32xf32, #tpu.memory_space<vmem>>, vector<1x8xf32>
    %cst_15 = arith.constant dense<0.000000e+00> : vector<2x8xf32>
    %24 = tpu.matmul %21, %22, %cst_15 {dimension_numbers = #tpu.dot_dimension_numbers<[1], [0], [0], [1], [0, 0, 1, 1], [], []>} : vector<2x32xf32>, vector<32x8xf32>, vector<2x8xf32> -> vector<2x8xf32>
    %25 = vector.broadcast %23 : vector<1x8xf32> to vector<2x8xf32>
    %26 = arith.addf %24, %25 : vector<2x8xf32>
    %c0_16 = arith.constant 0 : index
    %c0_17 = arith.constant 0 : index
    %27 = vector.load %arg3[%c0_16, %c0_17] : memref<2x8xf32, #tpu.memory_space<vmem>>, vector<2x8xf32>
    tpu.vector_store %arg3[%c0_16, %c0_17], %26 {strides = array<i32>} : memref<2x8xf32, #tpu.memory_space<vmem>>, vector<2x8xf32>,
    return
  }
  func.func @transform_0(%arg0: i32) -> (i32, i32) {
    %c0_i32 = arith.constant 0 : i32
    %c0_i32_0 = arith.constant 0 : i32
    return %arg0, %c0_i32 : i32, i32
  }
  func.func @transform_1(%arg0: i32) -> (i32, i32) {
    %c0_i32 = arith.constant 0 : i32
    %c0_i32_0 = arith.constant 0 : i32
    %c0_i32_1 = arith.constant 0 : i32
    return %c0_i32, %c0_i32_0 : i32, i32
  }
  func.func @transform_2(%arg0: i32) -> (i32, i32) {
    %c0_i32 = arith.constant 0 : i32
    %c0_i32_0 = arith.constant 0 : i32
    return %arg0, %c0_i32 : i32, i32
  }
}

</mosaic_0001>

<llo_original>
// kernel: tpu_custom_call.1
$region0: #{tpu_custom_call.1}
  #allocation0 [shape = 'u32[]', space=smem, size = 0x4, offset = 0x4, fixed_abs, tag = 'smem constant byte address 0x4 - core index']
  #allocation1 [shape = 'u32[144,128]{1,0:T(1,128)}', space=vmem, size = 0x12000, scoped, tag = 'internal scratch']
  %s0 = inlined_call_operand.vmem [shape: f32[2,1024], index: 0, kind: input, shape index: {}]
  %s1 = inlined_call_operand.vmem [shape: f32[1128,32], index: 1, kind: input, shape index: {}]
  %s2 = inlined_call_operand.hbm [shape: f32[2,8], index: 2, kind: output, shape index: {}]
  %s3 = sld [smem:[#allocation0]]
  $region18: #{tpu_custom_call.1} parent=0
    _
  %s5 = ssub.s32 1, %s3
  %s6 = scalar_select 0, %s5, %s3
  $region1: #{tpu_custom_call.1} parent=0
    #allocation2 [shape = 'u8[1024]{0}', space=vmem, size = 0x400, scoped, tag = 'output window, operand 0, single buffered']
    #allocation3 [shape = 's32[1]{0}', space=sflag, size = 0x4, scoped, tag = 'scoped memory for tpu_custom_call.1']
    %7 = vsyncpa [#allocation3], 0
    // Predicated region
    $region2: #{tpu_custom_call.1} parent=1 // pred_check
      _
    $region3: #{tpu_custom_call.1} parent=1 // pred_check_branch
      %9 = sbr.rel (0) target = $region5
    $region4: #{tpu_custom_call.1} parent=1 // pred_region
      _
    $region5: #{tpu_custom_call.1} parent=1 // pred_fallthru
      _
    // Predicated region
    $region6: #{tpu_custom_call.1} parent=1 // pred_check
      _
    $region7: #{tpu_custom_call.1} parent=1 // pred_check_branch
      %11 = sbr.rel (0) target = $region9
    $region8: #{tpu_custom_call.1} parent=1 // pred_region
      _
    $region9: #{tpu_custom_call.1} parent=1 // pred_fallthru
      _
    %v12 = vld [vmem:[%s0] sm:$0xff]
    %v13 = vld [vmem:[%s0 + $0x8] sm:$0xff]
    %v14 = vld [vmem:[%s1] sm:$0xff]
    %v15 = vld [vmem:[%s1 + $0x8] sm:$0xff]
    %v16 = vld [vmem:[%s1 + $0x10] sm:$0xff]
    %v17 = vld [vmem:[%s1 + $0x18] sm:$0xff]
    %v18 = vld [vmem:[%s1 + $0x20] sm:$0xff]
    %v19 = vld [vmem:[%s1 + $0x28] sm:$0xff]
    %v20 = vld [vmem:[%s1 + $0x30] sm:$0xff]
    %v21 = vld [vmem:[%s1 + $0x38] sm:$0xff]
    %v22 = vld [vmem:[%s1 + $0x40] sm:$0xff]
    %v23 = vld [vmem:[%s1 + $0x48] sm:$0xff]
    %v24 = vld [vmem:[%s1 + $0x50] sm:$0xff]
    %v25 = vld [vmem:[%s1 + $0x58] sm:$0xff]
    %v26 = vld [vmem:[%s1 + $0x60] sm:$0xff]
    %v27 = vld [vmem:[%s1 + $0x68] sm:$0xff]
    %v28 = vld [vmem:[%s1 + $0x70] sm:$0xff]
    %v29 = vld [vmem:[%s1 + $0x78] sm:$0xff]
    %v30 = vld [vmem:[%s1 + $0x80] sm:$0xff]
    %v31 = vld [vmem:[%s1 + $0x88] sm:$0xff]
    %v32 = vld [vmem:[%s1 + $0x90] sm:$0xff]
    %v33 = vld [vmem:[%s1 + $0x98] sm:$0xff]
    %v34 = vld [vmem:[%s1 + $0xa0] sm:$0xff]
    %v35 = vld [vmem:[%s1 + $0xa8] sm:$0xff]
    %v36 = vld [vmem:[%s1 + $0xb0] sm:$0xff]
    %v37 = vld [vmem:[%s1 + $0xb8] sm:$0xff]
    %v38 = vld [vmem:[%s1 + $0xc0] sm:$0xff]
    %v39 = vld [vmem:[%s1 + $0xc8] sm:$0xff]
    %v40 = vld [vmem:[%s1 + $0xd0] sm:$0xff]
    %v41 = vld [vmem:[%s1 + $0xd8] sm:$0xff]
    %v42 = vld [vmem:[%s1 + $0xe0] sm:$0xff]
    %v43 = vld [vmem:[%s1 + $0xe8] sm:$0xff]
    %v44 = vld [vmem:[%s1 + $0xf0] sm:$0xff]
    %v45 = vld [vmem:[%s1 + $0xf8] sm:$0xff]
    %v46 = vld [vmem:[%s1 + $0x100] sm:$0xff]
    %v47 = vld [vmem:[%s1 + $0x108] sm:$0xff]
    %v48 = vld [vmem:[%s1 + $0x110] sm:$0xff]
    %v49 = vld [vmem:[%s1 + $0x118] sm:$0xff]
    %v50 = vld [vmem:[%s1 + $0x120] sm:$0xff]
    %v51 = vld [vmem:[%s1 + $0x128] sm:$0xff]
    %v52 = vld [vmem:[%s1 + $0x130] sm:$0xff]
    %v53 = vld [vmem:[%s1 + $0x138] sm:$0xff]
    %v54 = vld [vmem:[%s1 + $0x140] sm:$0xff]
    %v55 = vld [vmem:[%s1 + $0x148] sm:$0xff]
    %v56 = vld [vmem:[%s1 + $0x150] sm:$0xff]
    %v57 = vld [vmem:[%s1 + $0x158] sm:$0xff]
    %v58 = vld [vmem:[%s1 + $0x160] sm:$0xff]
    %v59 = vld [vmem:[%s1 + $0x168] sm:$0xff]
    %v60 = vld [vmem:[%s1 + $0x170] sm:$0xff]
    %v61 = vld [vmem:[%s1 + $0x178] sm:$0xff]
    %v62 = vld [vmem:[%s1 + $0x180] sm:$0xff]
    %v63 = vld [vmem:[%s1 + $0x188] sm:$0xff]
    %v64 = vld [vmem:[%s1 + $0x190] sm:$0xff]
    %v65 = vld [vmem:[%s1 + $0x198] sm:$0xff]
    %v66 = vld [vmem:[%s1 + $0x1a0] sm:$0xff]
    %v67 = vld [vmem:[%s1 + $0x1a8] sm:$0xff]
    %v68 = vld [vmem:[%s1 + $0x1b0] sm:$0xff]
    %v69 = vld [vmem:[%s1 + $0x1b8] sm:$0xff]
    %v70 = vld [vmem:[%s1 + $0x1c0] sm:$0xff]
    %v71 = vld [vmem:[%s1 + $0x1c8] sm:$0xff]
    %v72 = vld [vmem:[%s1 + $0x1d0] sm:$0xff]
    %v73 = vld [vmem:[%s1 + $0x1d8] sm:$0xff]
    %v74 = vld [vmem:[%s1 + $0x1e0] sm:$0xff]
    %v75 = vld [vmem:[%s1 + $0x1e8] sm:$0xff]
    %v76 = vld [vmem:[%s1 + $0x1f0] sm:$0xff]
    %v77 = vld [vmem:[%s1 + $0x1f8] sm:$0xff]
    %v78 = vld [vmem:[%s1 + $0x200] sm:$0xff]
    %v79 = vld [vmem:[%s1 + $0x208] sm:$0xff]
    %v80 = vld [vmem:[%s1 + $0x210] sm:$0xff]
    %v81 = vld [vmem:[%s1 + $0x218] sm:$0xff]
    %v82 = vld [vmem:[%s1 + $0x220] sm:$0xff]
    %v83 = vld [vmem:[%s1 + $0x228] sm:$0xff]
    %v84 = vld [vmem:[%s1 + $0x230] sm:$0xff]
    %v85 = vld [vmem:[%s1 + $0x238] sm:$0xff]
    %v86 = vld [vmem:[%s1 + $0x240] sm:$0xff]
    %v87 = vld [vmem:[%s1 + $0x248] sm:$0xff]
    %v88 = vld [vmem:[%s1 + $0x250] sm:$0xff]
    %v89 = vld [vmem:[%s1 + $0x258] sm:$0xff]
    %v90 = vld [vmem:[%s1 + $0x260] sm:$0xff]
    %v91 = vld [vmem:[%s1 + $0x268] sm:$0xff]
    %v92 = vld [vmem:[%s1 + $0x270] sm:$0xff]
    %v93 = vld [vmem:[%s1 + $0x278] sm:$0xff]
    %v94 = vld [vmem:[%s1 + $0x280] sm:$0xff]
    %v95 = vld [vmem:[%s1 + $0x288] sm:$0xff]
    %v96 = vld [vmem:[%s1 + $0x290] sm:$0xff]
    %v97 = vld [vmem:[%s1 + $0x298] sm:$0xff]
    %v98 = vld [vmem:[%s1 + $0x2a0] sm:$0xff]
    %v99 = vld [vmem:[%s1 + $0x2a8] sm:$0xff]
    %v100 = vld [vmem:[%s1 + $0x2b0] sm:$0xff]
    %v101 = vld [vmem:[%s1 + $0x2b8] sm:$0xff]
    %v102 = vld [vmem:[%s1 + $0x2c0] sm:$0xff]
    %v103 = vld [vmem:[%s1 + $0x2c8] sm:$0xff]
    %v104 = vld [vmem:[%s1 + $0x2d0] sm:$0xff]
    %v105 = vld [vmem:[%s1 + $0x2d8] sm:$0xff]
    %v106 = vld [vmem:[%s1 + $0x2e0] sm:$0xff]
    %v107 = vld [vmem:[%s1 + $0x2e8] sm:$0xff]
    %v108 = vld [vmem:[%s1 + $0x2f0] sm:$0xff]
    %v109 = vld [vmem:[%s1 + $0x2f8] sm:$0xff]
    %v110 = vld [vmem:[%s1 + $0x300] sm:$0xff]
    %v111 = vld [vmem:[%s1 + $0x308] sm:$0xff]
    %v112 = vld [vmem:[%s1 + $0x310] sm:$0xff]
    %v113 = vld [vmem:[%s1 + $0x318] sm:$0xff]
    %v114 = vld [vmem:[%s1 + $0x320] sm:$0xff]
    %v115 = vld [vmem:[%s1 + $0x328] sm:$0xff]
    %v116 = vld [vmem:[%s1 + $0x330] sm:$0xff]
    %v117 = vld [vmem:[%s1 + $0x338] sm:$0xff]
    %v118 = vld [vmem:[%s1 + $0x340] sm:$0xff]
    %v119 = vld [vmem:[%s1 + $0x348] sm:$0xff]
    %v120 = vld [vmem:[%s1 + $0x350] sm:$0xff]
    %v121 = vld [vmem:[%s1 + $0x358] sm:$0xff]
    %v122 = vld [vmem:[%s1 + $0x360] sm:$0xff]
    %v123 = vld [vmem:[%s1 + $0x368] sm:$0xff]
    %v124 = vld [vmem:[%s1 + $0x370] sm:$0xff]
    %v125 = vld [vmem:[%s1 + $0x378] sm:$0xff]
    %v126 = vld [vmem:[%s1 + $0x380] sm:$0xff]
    %v127 = vld [vmem:[%s1 + $0x388] sm:$0xff]
    %v128 = vld [vmem:[%s1 + $0x390] sm:$0xff]
    %v129 = vld [vmem:[%s1 + $0x398] sm:$0xff]
    %v130 = vld [vmem:[%s1 + $0x3a0] sm:$0xff]
    %v131 = vld [vmem:[%s1 + $0x3a8] sm:$0xff]
    %v132 = vld [vmem:[%s1 + $0x3b0] sm:$0xff]
    %v133 = vld [vmem:[%s1 + $0x3b8] sm:$0xff]
    %v134 = vld [vmem:[%s1 + $0x3c0] sm:$0xff]
    %v135 = vld [vmem:[%s1 + $0x3c8] sm:$0xff]
    %v136 = vld [vmem:[%s1 + $0x3d0] sm:$0xff]
    %v137 = vld [vmem:[%s1 + $0x3d8] sm:$0xff]
    %v138 = vld [vmem:[%s1 + $0x3e0] sm:$0xff]
    %v139 = vld [vmem:[%s1 + $0x3e8] sm:$0xff]
    %v140 = vld [vmem:[%s1 + $0x3f0] sm:$0xff]
    %v141 = vld [vmem:[%s1 + $0x3f8] sm:$0xff]
    %v142 = vld [vmem:[%s1 + $0x460] sm:$0x1]
    %v143 = vlaneseq
    %v144 = vshrl.u32 %v143, 7
    %v145 = vsub.s32 0, %v144
    %v146 = vrot.slane %v142, %v145
    %v149 = vcombine.high %v12, %v12
    %v151 = vunpack.c.l.s4 1983009808
    %v152 = vunpack.c.0.s8 %v151
    %v153 = vlaneseq
    %v154 = vshrl.u32 %v153, 7
    %v155 = vsub.s32 %v152, %v154
    %v156 = vrot.slane %v12, %v155
    %v158 = vunpack.c.l.s4 1983009808
    %v159 = vunpack.c.0.s8 %v158
    %v160 = vlaneseq
    %v161 = vshrl.u32 %v160, 7
    %v162 = vsub.s32 %v159, %v161
    %v163 = vrot.slane %v149, %v162
    %v164 = vcombine.high %v156, %v156
    %v165 = vcombine.high %v163, %v163
    %v166 = vcombine.high %v13, %v13
    %v168 = vunpack.c.l.s4 1983009808
    %v169 = vunpack.c.0.s8 %v168
    %v170 = vlaneseq
    %v171 = vshrl.u32 %v170, 7
    %v172 = vsub.s32 %v169, %v171
    %v173 = vrot.slane %v13, %v172
    %v175 = vunpack.c.l.s4 1983009808
    %v176 = vunpack.c.0.s8 %v175
    %v177 = vlaneseq
    %v178 = vshrl.u32 %v177, 7
    %v179 = vsub.s32 %v176, %v178
    %v180 = vrot.slane %v166, %v179
    %v181 = vcombine.high %v173, %v173
    %v182 = vcombine.high %v180, %v180
    %191 = vmatprep.subr.mxu0 0.0
    %192 = vmatpush1.msra.mxu0 %v14
    %193 = vmatprep.subr.mxu0 0.0
    %194 = vmatpush1.msra.mxu0 %v15
    %195 = vmatprep.subr.mxu0 0.0
    %196 = vmatpush1.msra.mxu0 %v16
    %197 = vmatprep.subr.mxu0 0.0
    %198 = vmatpush1.msra.mxu0 %v17
    %199 = vmatprep.subr.mxu0 0.0
    %200 = vmatpush1.msra.mxu0 %v18
    %201 = vmatprep.subr.mxu0 0.0
    %202 = vmatpush1.msra.mxu0 %v19
    %203 = vmatprep.subr.mxu0 0.0
    %204 = vmatpush1.msra.mxu0 %v20
    %205 = vmatprep.subr.mxu0 0.0
    %206 = vmatpush1.msra.mxu0 %v21
    %207 = vmatprep.subr.mxu0 0.0
    %208 = vmatpush1.msra.mxu0 %v22
    %209 = vmatprep.subr.mxu0 0.0
    %210 = vmatpush1.msra.mxu0 %v23
    %211 = vmatprep.subr.mxu0 0.0
    %212 = vmatpush1.msra.mxu0 %v24
    %213 = vmatprep.subr.mxu0 0.0
    %214 = vmatpush1.msra.mxu0 %v25
    %215 = vmatprep.subr.mxu0 0.0
    %216 = vmatpush1.msra.mxu0 %v26
    %217 = vmatprep.subr.mxu0 0.0
    %218 = vmatpush1.msra.mxu0 %v27
    %219 = vmatprep.subr.mxu0 0.0
    %220 = vmatpush1.msra.mxu0 %v28
    %221 = vmatprep.subr.mxu0 0.0
    %222 = vmatpush1.msra.mxu0 %v29
    %223 = vmatprep.subr.mxu0 0.0
    %224 = vmatpush1.msra.mxu0 %v30
    %225 = vmatprep.subr.mxu0 0.0
    %226 = vmatpush1.msra.mxu0 %v31
    %227 = vmatprep.subr.mxu0 0.0
    %228 = vmatpush1.msra.mxu0 %v32
    %229 = vmatprep.subr.mxu0 0.0
    %230 = vmatpush1.msra.mxu0 %v33
    %231 = vmatprep.subr.mxu0 0.0
    %232 = vmatpush1.msra.mxu0 %v34
    %233 = vmatprep.subr.mxu0 0.0
    %234 = vmatpush1.msra.mxu0 %v35
    %235 = vmatprep.subr.mxu0 0.0
    %236 = vmatpush1.msra.mxu0 %v36
    %237 = vmatprep.subr.mxu0 0.0
    %238 = vmatpush1.msra.mxu0 %v37
    %239 = vmatprep.subr.mxu0 0.0
    %240 = vmatpush1.msra.mxu0 %v38
    %241 = vmatprep.subr.mxu0 0.0
    %242 = vmatpush1.msra.mxu0 %v39
    %243 = vmatprep.subr.mxu0 0.0
    %244 = vmatpush1.msra.mxu0 %v40
    %245 = vmatprep.subr.mxu0 0.0
    %246 = vmatpush1.msra.mxu0 %v41
    %247 = vmatprep.subr.mxu0 0.0
    %248 = vmatpush1.msra.mxu0 %v42
    %249 = vmatprep.subr.mxu0 0.0
    %250 = vmatpush1.msra.mxu0 %v43
    %251 = vmatprep.subr.mxu0 0.0
    %252 = vmatpush1.msra.mxu0 %v44
    %253 = vmatprep.subr.mxu0 0.0
    %254 = vmatpush1.msra.mxu0 %v45
    %255 = vmatprep.mubr.f32.mxu0 %v164
    %256 = vmatmul.mubr.f32.gmra.mrb[0].mxu0 %v156
    %v257 = vpop.f32.mrb[0].mxu0
    %v258 = vadd.f32 %v146, %v257
    %v259 = vpop.f32.mrb[0].mxu0
    %260 = vdwg.mxu0
    %261 = vmatprep.subr.mxu0 0.0
    %262 = vmatpush1.msra.mxu0 %v46
    %263 = vmatprep.subr.mxu0 0.0
    %264 = vmatpush1.msra.mxu0 %v47
    %265 = vmatprep.subr.mxu0 0.0
    %266 = vmatpush1.msra.mxu0 %v48
    %267 = vmatprep.subr.mxu0 0.0
    %268 = vmatpush1.msra.mxu0 %v49
    %269 = vmatprep.subr.mxu0 0.0
    %270 = vmatpush1.msra.mxu0 %v50
    %271 = vmatprep.subr.mxu0 0.0
    %272 = vmatpush1.msra.mxu0 %v51
    %273 = vmatprep.subr.mxu0 0.0
    %274 = vmatpush1.msra.mxu0 %v52
    %275 = vmatprep.subr.mxu0 0.0
    %276 = vmatpush1.msra.mxu0 %v53
    %277 = vmatprep.subr.mxu0 0.0
    %278 = vmatpush1.msra.mxu0 %v54
    %279 = vmatprep.subr.mxu0 0.0
    %280 = vmatpush1.msra.mxu0 %v55
    %281 = vmatprep.subr.mxu0 0.0
    %282 = vmatpush1.msra.mxu0 %v56
    %283 = vmatprep.subr.mxu0 0.0
    %284 = vmatpush1.msra.mxu0 %v57
    %285 = vmatprep.subr.mxu0 0.0
    %286 = vmatpush1.msra.mxu0 %v58
    %287 = vmatprep.subr.mxu0 0.0
    %288 = vmatpush1.msra.mxu0 %v59
    %289 = vmatprep.subr.mxu0 0.0
    %290 = vmatpush1.msra.mxu0 %v60
    %291 = vmatprep.subr.mxu0 0.0
    %292 = vmatpush1.msra.mxu0 %v61
    %293 = vmatprep.subr.mxu0 0.0
    %294 = vmatpush1.msra.mxu0 %v62
    %295 = vmatprep.subr.mxu0 0.0
    %296 = vmatpush1.msra.mxu0 %v63
    %297 = vmatprep.subr.mxu0 0.0
    %298 = vmatpush1.msra.mxu0 %v64
    %299 = vmatprep.subr.mxu0 0.0
    %300 = vmatpush1.msra.mxu0 %v65
    %301 = vmatprep.subr.mxu0 0.0
    %302 = vmatpush1.msra.mxu0 %v66
    %303 = vmatprep.subr.mxu0 0.0
    %304 = vmatpush1.msra.mxu0 %v67
    %305 = vmatprep.subr.mxu0 0.0
    %306 = vmatpush1.msra.mxu0 %v68
    %307 = vmatprep.subr.mxu0 0.0
    %308 = vmatpush1.msra.mxu0 %v69
    %309 = vmatprep.subr.mxu0 0.0
    %310 = vmatpush1.msra.mxu0 %v70
    %311 = vmatprep.subr.mxu0 0.0
    %312 = vmatpush1.msra.mxu0 %v71
    %313 = vmatprep.subr.mxu0 0.0
    %314 = vmatpush1.msra.mxu0 %v72
    %315 = vmatprep.subr.mxu0 0.0
    %316 = vmatpush1.msra.mxu0 %v73
    %317 = vmatprep.subr.mxu0 0.0
    %318 = vmatpush1.msra.mxu0 %v74
    %319 = vmatprep.subr.mxu0 0.0
    %320 = vmatpush1.msra.mxu0 %v75
    %321 = vmatprep.subr.mxu0 0.0
    %322 = vmatpush1.msra.mxu0 %v76
    %323 = vmatprep.subr.mxu0 0.0
    %324 = vmatpush1.msra.mxu0 %v77
    %325 = vmatprep.mubr.f32.mxu0 %v165
    %326 = vmatmul.mubr.f32.gmra.mrb[0].mxu0 %v163
    %v327 = vpop.f32.mrb[0].mxu0
    %v328 = vadd.f32 %v258, %v327
    %v329 = vpop.f32.mrb[0].mxu0
    %330 = vdwg.mxu0
    %331 = vmatprep.subr.mxu0 0.0
    %332 = vmatpush1.msra.mxu0 %v78
    %333 = vmatprep.subr.mxu0 0.0
    %334 = vmatpush1.msra.mxu0 %v79
    %335 = vmatprep.subr.mxu0 0.0
    %336 = vmatpush1.msra.mxu0 %v80
    %337 = vmatprep.subr.mxu0 0.0
    %338 = vmatpush1.msra.mxu0 %v81
    %339 = vmatprep.subr.mxu0 0.0
    %340 = vmatpush1.msra.mxu0 %v82
    %341 = vmatprep.subr.mxu0 0.0
    %342 = vmatpush1.msra.mxu0 %v83
    %343 = vmatprep.subr.mxu0 0.0
    %344 = vmatpush1.msra.mxu0 %v84
    %345 = vmatprep.subr.mxu0 0.0
    %346 = vmatpush1.msra.mxu0 %v85
    %347 = vmatprep.subr.mxu0 0.0
    %348 = vmatpush1.msra.mxu0 %v86
    %349 = vmatprep.subr.mxu0 0.0
    %350 = vmatpush1.msra.mxu0 %v87
    %351 = vmatprep.subr.mxu0 0.0
    %352 = vmatpush1.msra.mxu0 %v88
    %353 = vmatprep.subr.mxu0 0.0
    %354 = vmatpush1.msra.mxu0 %v89
    %355 = vmatprep.subr.mxu0 0.0
    %356 = vmatpush1.msra.mxu0 %v90
    %357 = vmatprep.subr.mxu0 0.0
    %358 = vmatpush1.msra.mxu0 %v91
    %359 = vmatprep.subr.mxu0 0.0
    %360 = vmatpush1.msra.mxu0 %v92
    %361 = vmatprep.subr.mxu0 0.0
    %362 = vmatpush1.msra.mxu0 %v93
    %363 = vmatprep.subr.mxu0 0.0
    %364 = vmatpush1.msra.mxu0 %v94
    %365 = vmatprep.subr.mxu0 0.0
    %366 = vmatpush1.msra.mxu0 %v95
    %367 = vmatprep.subr.mxu0 0.0
    %368 = vmatpush1.msra.mxu0 %v96
    %369 = vmatprep.subr.mxu0 0.0
    %370 = vmatpush1.msra.mxu0 %v97
    %371 = vmatprep.subr.mxu0 0.0
    %372 = vmatpush1.msra.mxu0 %v98
    %373 = vmatprep.subr.mxu0 0.0
    %374 = vmatpush1.msra.mxu0 %v99
    %375 = vmatprep.subr.mxu0 0.0
    %376 = vmatpush1.msra.mxu0 %v100
    %377 = vmatprep.subr.mxu0 0.0
    %378 = vmatpush1.msra.mxu0 %v101
    %379 = vmatprep.subr.mxu0 0.0
    %380 = vmatpush1.msra.mxu0 %v102
    %381 = vmatprep.subr.mxu0 0.0
    %382 = vmatpush1.msra.mxu0 %v103
    %383 = vmatprep.subr.mxu0 0.0
    %384 = vmatpush1.msra.mxu0 %v104
    %385 = vmatprep.subr.mxu0 0.0
    %386 = vmatpush1.msra.mxu0 %v105
    %387 = vmatprep.subr.mxu0 0.0
    %388 = vmatpush1.msra.mxu0 %v106
    %389 = vmatprep.subr.mxu0 0.0
    %390 = vmatpush1.msra.mxu0 %v107
    %391 = vmatprep.subr.mxu0 0.0
    %392 = vmatpush1.msra.mxu0 %v108
    %393 = vmatprep.subr.mxu0 0.0
    %394 = vmatpush1.msra.mxu0 %v109
    %395 = vmatprep.mubr.f32.mxu0 %v181
    %396 = vmatmul.mubr.f32.gmra.mrb[0].mxu0 %v173
    %v397 = vpop.f32.mrb[0].mxu0
    %v398 = vadd.f32 %v328, %v397
    %v399 = vpop.f32.mrb[0].mxu0
    %400 = vdwg.mxu0
    %401 = vmatprep.subr.mxu0 0.0
    %402 = vmatpush1.msra.mxu0 %v110
    %403 = vmatprep.subr.mxu0 0.0
    %404 = vmatpush1.msra.mxu0 %v111
    %405 = vmatprep.subr.mxu0 0.0
    %406 = vmatpush1.msra.mxu0 %v112
    %407 = vmatprep.subr.mxu0 0.0
    %408 = vmatpush1.msra.mxu0 %v113
    %409 = vmatprep.subr.mxu0 0.0
    %410 = vmatpush1.msra.mxu0 %v114
    %411 = vmatprep.subr.mxu0 0.0
    %412 = vmatpush1.msra.mxu0 %v115
    %413 = vmatprep.subr.mxu0 0.0
    %414 = vmatpush1.msra.mxu0 %v116
    %415 = vmatprep.subr.mxu0 0.0
    %416 = vmatpush1.msra.mxu0 %v117
    %417 = vmatprep.subr.mxu0 0.0
    %418 = vmatpush1.msra.mxu0 %v118
    %419 = vmatprep.subr.mxu0 0.0
    %420 = vmatpush1.msra.mxu0 %v119
    %421 = vmatprep.subr.mxu0 0.0
    %422 = vmatpush1.msra.mxu0 %v120
    %423 = vmatprep.subr.mxu0 0.0
    %424 = vmatpush1.msra.mxu0 %v121
    %425 = vmatprep.subr.mxu0 0.0
    %426 = vmatpush1.msra.mxu0 %v122
    %427 = vmatprep.subr.mxu0 0.0
    %428 = vmatpush1.msra.mxu0 %v123
    %429 = vmatprep.subr.mxu0 0.0
    %430 = vmatpush1.msra.mxu0 %v124
    %431 = vmatprep.subr.mxu0 0.0
    %432 = vmatpush1.msra.mxu0 %v125
    %433 = vmatprep.subr.mxu0 0.0
    %434 = vmatpush1.msra.mxu0 %v126
    %435 = vmatprep.subr.mxu0 0.0
    %436 = vmatpush1.msra.mxu0 %v127
    %437 = vmatprep.subr.mxu0 0.0
    %438 = vmatpush1.msra.mxu0 %v128
    %439 = vmatprep.subr.mxu0 0.0
    %440 = vmatpush1.msra.mxu0 %v129
    %441 = vmatprep.subr.mxu0 0.0
    %442 = vmatpush1.msra.mxu0 %v130
    %443 = vmatprep.subr.mxu0 0.0
    %444 = vmatpush1.msra.mxu0 %v131
    %445 = vmatprep.subr.mxu0 0.0
    %446 = vmatpush1.msra.mxu0 %v132
    %447 = vmatprep.subr.mxu0 0.0
    %448 = vmatpush1.msra.mxu0 %v133
    %449 = vmatprep.subr.mxu0 0.0
    %450 = vmatpush1.msra.mxu0 %v134
    %451 = vmatprep.subr.mxu0 0.0
    %452 = vmatpush1.msra.mxu0 %v135
    %453 = vmatprep.subr.mxu0 0.0
    %454 = vmatpush1.msra.mxu0 %v136
    %455 = vmatprep.subr.mxu0 0.0
    %456 = vmatpush1.msra.mxu0 %v137
    %457 = vmatprep.subr.mxu0 0.0
    %458 = vmatpush1.msra.mxu0 %v138
    %459 = vmatprep.subr.mxu0 0.0
    %460 = vmatpush1.msra.mxu0 %v139
    %461 = vmatprep.subr.mxu0 0.0
    %462 = vmatpush1.msra.mxu0 %v140
    %463 = vmatprep.subr.mxu0 0.0
    %464 = vmatpush1.msra.mxu0 %v141
    %465 = vmatprep.mubr.f32.mxu0 %v182
    %466 = vmatmul.mubr.f32.gmra.mrb[0].mxu0 %v180
    %v467 = vpop.f32.mrb[0].mxu0
    %v468 = vadd.f32 %v398, %v467
    %v469 = vpop.f32.mrb[0].mxu0
    %470 = vdwg.mxu0
    %v471 = vmax.f32 %v468, 0.0
    %v472 = vld [vmem:[%s1 + $0x400] sm:$0xff]
    %v473 = vld [vmem:[%s1 + $0x408] sm:$0xff]
    %v474 = vld [vmem:[%s1 + $0x410] sm:$0xff]
    %v475 = vld [vmem:[%s1 + $0x418] sm:$0xff]
    %v476 = vld [vmem:[%s1 + $0x461] sm:$0x1]
    %v477 = vlaneseq
    %v478 = vshrl.u32 %v477, 7
    %v479 = vsub.s32 0, %v478
    %v480 = vrot.slane %v476, %v479
    %vm481 = vcmask 261120
    %v483 = vsel %vm481, %v471, 0
    %485 = vmatprep.subr.mxu0 0.0
    %486 = vmatpush1.msra.mxu0 %v472
    %487 = vmatprep.subr.mxu0 0.0
    %488 = vmatpush1.msra.mxu0 %v473
    %489 = vmatprep.subr.mxu0 0.0
    %490 = vmatpush1.msra.mxu0 %v474
    %491 = vmatprep.subr.mxu0 0.0
    %492 = vmatpush1.msra.mxu0 %v475
    %493 = vmatprep.subr.mxu0 0.0
    %494 = vmatpush1.msra.mxu0 0.0
    %495 = vmatprep.subr.mxu0 0.0
    %496 = vmatpush1.msra.mxu0 0.0
    %497 = vmatprep.subr.mxu0 0.0
    %498 = vmatpush1.msra.mxu0 0.0
    %499 = vmatprep.subr.mxu0 0.0
    %500 = vmatpush1.msra.mxu0 0.0
    %501 = vmatprep.subr.mxu0 0.0
    %502 = vmatpush1.msra.mxu0 0.0
    %503 = vmatprep.subr.mxu0 0.0
    %504 = vmatpush1.msra.mxu0 0.0
    %505 = vmatprep.subr.mxu0 0.0
    %506 = vmatpush1.msra.mxu0 0.0
    %507 = vmatprep.subr.mxu0 0.0
    %508 = vmatpush1.msra.mxu0 0.0
    %509 = vmatprep.subr.mxu0 0.0
    %510 = vmatpush1.msra.mxu0 0.0
    %511 = vmatprep.subr.mxu0 0.0
    %512 = vmatpush1.msra.mxu0 0.0
    %513 = vmatprep.subr.mxu0 0.0
    %514 = vmatpush1.msra.mxu0 0.0
    %515 = vmatprep.subr.mxu0 0.0
    %516 = vmatpush1.msra.mxu0 0.0
    %517 = vmatprep.subr.mxu0 0.0
    %518 = vmatpush1.msra.mxu0 0.0
    %519 = vmatprep.subr.mxu0 0.0
    %520 = vmatpush1.msra.mxu0 0.0
    %521 = vmatprep.subr.mxu0 0.0
    %522 = vmatpush1.msra.mxu0 0.0
    %523 = vmatprep.subr.mxu0 0.0
    %524 = vmatpush1.msra.mxu0 0.0
    %525 = vmatprep.subr.mxu0 0.0
    %526 = vmatpush1.msra.mxu0 0.0
    %527 = vmatprep.subr.mxu0 0.0
    %528 = vmatpush1.msra.mxu0 0.0
    %529 = vmatprep.subr.mxu0 0.0
    %530 = vmatpush1.msra.mxu0 0.0
    %531 = vmatprep.subr.mxu0 0.0
    %532 = vmatpush1.msra.mxu0 0.0
    %533 = vmatprep.subr.mxu0 0.0
    %534 = vmatpush1.msra.mxu0 0.0
    %535 = vmatprep.subr.mxu0 0.0
    %536 = vmatpush1.msra.mxu0 0.0
    %537 = vmatprep.subr.mxu0 0.0
    %538 = vmatpush1.msra.mxu0 0.0
    %539 = vmatprep.subr.mxu0 0.0
    %540 = vmatpush1.msra.mxu0 0.0
    %541 = vmatprep.subr.mxu0 0.0
    %542 = vmatpush1.msra.mxu0 0.0
    %543 = vmatprep.subr.mxu0 0.0
    %544 = vmatpush1.msra.mxu0 0.0
    %545 = vmatprep.subr.mxu0 0.0
    %546 = vmatpush1.msra.mxu0 0.0
    %547 = vmatprep.subr.mxu0 0.0
    %548 = vmatpush1.msra.mxu0 0.0
    %549 = vmatprep.mubr.f32.mxu0 0.0
    %550 = vmatmul.mubr.f32.gmra.mrb[0].mxu0 %v483
    %v551 = vpop.f32.mrb[0].mxu0
    %v552 = vadd.f32 %v480, %v551
    %v553 = vpop.f32.mrb[0].mxu0
    %554 = vdwg.mxu0
    %v555 = vmax.f32 %v552, 0.0
    %v556 = vld [vmem:[%s1 + $0x420] sm:$0xff]
    %v557 = vld [vmem:[%s1 + $0x428] sm:$0xff]
    %v558 = vld [vmem:[%s1 + $0x430] sm:$0xff]
    %v559 = vld [vmem:[%s1 + $0x438] sm:$0xff]
    %v560 = vld [vmem:[%s1 + $0x462] sm:$0x1]
    %v561 = vlaneseq
    %v562 = vshrl.u32 %v561, 7
    %v563 = vsub.s32 0, %v562
    %v564 = vrot.slane %v560, %v563
    %v566 = vsel %vm481, %v555, 0
    %568 = vmatprep.subr.mxu0 0.0
    %569 = vmatpush1.msra.mxu0 %v556
    %570 = vmatprep.subr.mxu0 0.0
    %571 = vmatpush1.msra.mxu0 %v557
    %572 = vmatprep.subr.mxu0 0.0
    %573 = vmatpush1.msra.mxu0 %v558
    %574 = vmatprep.subr.mxu0 0.0
    %575 = vmatpush1.msra.mxu0 %v559
    %576 = vmatprep.subr.mxu0 0.0
    %577 = vmatpush1.msra.mxu0 0.0
    %578 = vmatprep.subr.mxu0 0.0
    %579 = vmatpush1.msra.mxu0 0.0
    %580 = vmatprep.subr.mxu0 0.0
    %581 = vmatpush1.msra.mxu0 0.0
    %582 = vmatprep.subr.mxu0 0.0
    %583 = vmatpush1.msra.mxu0 0.0
    %584 = vmatprep.subr.mxu0 0.0
    %585 = vmatpush1.msra.mxu0 0.0
    %586 = vmatprep.subr.mxu0 0.0
    %587 = vmatpush1.msra.mxu0 0.0
    %588 = vmatprep.subr.mxu0 0.0
    %589 = vmatpush1.msra.mxu0 0.0
    %590 = vmatprep.subr.mxu0 0.0
    %591 = vmatpush1.msra.mxu0 0.0
    %592 = vmatprep.subr.mxu0 0.0
    %593 = vmatpush1.msra.mxu0 0.0
    %594 = vmatprep.subr.mxu0 0.0
    %595 = vmatpush1.msra.mxu0 0.0
    %596 = vmatprep.subr.mxu0 0.0
    %597 = vmatpush1.msra.mxu0 0.0
    %598 = vmatprep.subr.mxu0 0.0
    %599 = vmatpush1.msra.mxu0 0.0
    %600 = vmatprep.subr.mxu0 0.0
    %601 = vmatpush1.msra.mxu0 0.0
    %602 = vmatprep.subr.mxu0 0.0
    %603 = vmatpush1.msra.mxu0 0.0
    %604 = vmatprep.subr.mxu0 0.0
    %605 = vmatpush1.msra.mxu0 0.0
    %606 = vmatprep.subr.mxu0 0.0
    %607 = vmatpush1.msra.mxu0 0.0
    %608 = vmatprep.subr.mxu0 0.0
    %609 = vmatpush1.msra.mxu0 0.0
    %610 = vmatprep.subr.mxu0 0.0
    %611 = vmatpush1.msra.mxu0 0.0
    %612 = vmatprep.subr.mxu0 0.0
    %613 = vmatpush1.msra.mxu0 0.0
    %614 = vmatprep.subr.mxu0 0.0
    %615 = vmatpush1.msra.mxu0 0.0
    %616 = vmatprep.subr.mxu0 0.0
    %617 = vmatpush1.msra.mxu0 0.0
    %618 = vmatprep.subr.mxu0 0.0
    %619 = vmatpush1.msra.mxu0 0.0
    %620 = vmatprep.subr.mxu0 0.0
    %621 = vmatpush1.msra.mxu0 0.0
    %622 = vmatprep.subr.mxu0 0.0
    %623 = vmatpush1.msra.mxu0 0.0
    %624 = vmatprep.subr.mxu0 0.0
    %625 = vmatpush1.msra.mxu0 0.0
    %626 = vmatprep.subr.mxu0 0.0
    %627 = vmatpush1.msra.mxu0 0.0
    %628 = vmatprep.subr.mxu0 0.0
    %629 = vmatpush1.msra.mxu0 0.0
    %630 = vmatprep.subr.mxu0 0.0
    %631 = vmatpush1.msra.mxu0 0.0
    %632 = vmatprep.mubr.f32.mxu0 0.0
    %633 = vmatmul.mubr.f32.gmra.mrb[0].mxu0 %v566
    %v634 = vpop.f32.mrb[0].mxu0
    %v635 = vadd.f32 %v564, %v634
    %v636 = vpop.f32.mrb[0].mxu0
    %637 = vdwg.mxu0
    %v638 = vmax.f32 %v635, 0.0
    %v639 = vld [vmem:[%s1 + $0x440] sm:$0xff]
    %v640 = vld [vmem:[%s1 + $0x448] sm:$0xff]
    %v641 = vld [vmem:[%s1 + $0x450] sm:$0xff]
    %v642 = vld [vmem:[%s1 + $0x458] sm:$0xff]
    %v643 = vld [vmem:[%s1 + $0x463] sm:$0x1]
    %v644 = vlaneseq
    %v645 = vshrl.u32 %v644, 7
    %v646 = vsub.s32 0, %v645
    %v647 = vrot.slane %v643, %v646
    %v649 = vsel %vm481, %v638, 0
    %651 = vmatprep.subr.mxu0 0.0
    %652 = vmatpush1.msra.mxu0 %v639
    %653 = vmatprep.subr.mxu0 0.0
    %654 = vmatpush1.msra.mxu0 %v640
    %655 = vmatprep.subr.mxu0 0.0
    %656 = vmatpush1.msra.mxu0 %v641
    %657 = vmatprep.subr.mxu0 0.0
    %658 = vmatpush1.msra.mxu0 %v642
    %659 = vmatprep.subr.mxu0 0.0
    %660 = vmatpush1.msra.mxu0 0.0
    %661 = vmatprep.subr.mxu0 0.0
    %662 = vmatpush1.msra.mxu0 0.0
    %663 = vmatprep.subr.mxu0 0.0
    %664 = vmatpush1.msra.mxu0 0.0
    %665 = vmatprep.subr.mxu0 0.0
    %666 = vmatpush1.msra.mxu0 0.0
    %667 = vmatprep.subr.mxu0 0.0
    %668 = vmatpush1.msra.mxu0 0.0
    %669 = vmatprep.subr.mxu0 0.0
    %670 = vmatpush1.msra.mxu0 0.0
    %671 = vmatprep.subr.mxu0 0.0
    %672 = vmatpush1.msra.mxu0 0.0
    %673 = vmatprep.subr.mxu0 0.0
    %674 = vmatpush1.msra.mxu0 0.0
    %675 = vmatprep.subr.mxu0 0.0
    %676 = vmatpush1.msra.mxu0 0.0
    %677 = vmatprep.subr.mxu0 0.0
    %678 = vmatpush1.msra.mxu0 0.0
    %679 = vmatprep.subr.mxu0 0.0
    %680 = vmatpush1.msra.mxu0 0.0
    %681 = vmatprep.subr.mxu0 0.0
    %682 = vmatpush1.msra.mxu0 0.0
    %683 = vmatprep.subr.mxu0 0.0
    %684 = vmatpush1.msra.mxu0 0.0
    %685 = vmatprep.subr.mxu0 0.0
    %686 = vmatpush1.msra.mxu0 0.0
    %687 = vmatprep.subr.mxu0 0.0
    %688 = vmatpush1.msra.mxu0 0.0
    %689 = vmatprep.subr.mxu0 0.0
    %690 = vmatpush1.msra.mxu0 0.0
    %691 = vmatprep.subr.mxu0 0.0
    %692 = vmatpush1.msra.mxu0 0.0
    %693 = vmatprep.subr.mxu0 0.0
    %694 = vmatpush1.msra.mxu0 0.0
    %695 = vmatprep.subr.mxu0 0.0
    %696 = vmatpush1.msra.mxu0 0.0
    %697 = vmatprep.subr.mxu0 0.0
    %698 = vmatpush1.msra.mxu0 0.0
    %699 = vmatprep.subr.mxu0 0.0
    %700 = vmatpush1.msra.mxu0 0.0
    %701 = vmatprep.subr.mxu0 0.0
    %702 = vmatpush1.msra.mxu0 0.0
    %703 = vmatprep.subr.mxu0 0.0
    %704 = vmatpush1.msra.mxu0 0.0
    %705 = vmatprep.subr.mxu0 0.0
    %706 = vmatpush1.msra.mxu0 0.0
    %707 = vmatprep.subr.mxu0 0.0
    %708 = vmatpush1.msra.mxu0 0.0
    %709 = vmatprep.subr.mxu0 0.0
    %710 = vmatpush1.msra.mxu0 0.0
    %711 = vmatprep.subr.mxu0 0.0
    %712 = vmatpush1.msra.mxu0 0.0
    %713 = vmatprep.subr.mxu0 0.0
    %714 = vmatpush1.msra.mxu0 0.0
    %715 = vmatprep.mubr.f32.mxu0 0.0
    %716 = vmatmul.mubr.f32.gmra.mrb[0].mxu0 %v649
    %v717 = vpop.f32.mrb[0].mxu0
    %v718 = vadd.f32 %v647, %v717
    %v719 = vpop.f32.mrb[0].mxu0
    %720 = vdwg.mxu0
    %vm721 = vcmask 58368
    %722 = vst.msk [vmem:[#allocation2] sm:$0x3] %vm721, %v718
    // Predicated region
    $region10: #{tpu_custom_call.1} parent=1 // pred_check
      _
    $region11: #{tpu_custom_call.1} parent=1 // pred_check_branch
      %724 = sbr.rel (0) target = $region13
    $region12: #{tpu_custom_call.1} parent=1 // pred_region
      %s726 = ssub.s32 32, 32
      %727 = vsyncadd [#allocation3], %s726
      %s729 = sshll.u32 [#allocation2], 4
      %s730 = int_to_ptr.vmem [resolvable:$true] %s729
      %732 = dma.vmem_to_hbm [thread:$0]  %s730, 32, %s2, [#allocation3]
    $region13: #{tpu_custom_call.1} parent=1 // pred_fallthru
      _
    // Predicated region
    $region14: #{tpu_custom_call.1} parent=1 // pred_check
      _
    $region15: #{tpu_custom_call.1} parent=1 // pred_check_branch
      %734 = sbr.rel (0) target = $region17
    $region16: #{tpu_custom_call.1} parent=1 // pred_region
      %735 = dma.done [#allocation3], 32
    $region17: #{tpu_custom_call.1} parent=1 // pred_fallthru
      _
    %736 = vsyncpa [#allocation3], 1

</llo_original>
